<compile_context>
chip_gen: v6e
topology: v6e:2x2x1
jax: 0.10.0
libtpu: 0.0.40
codegen_flags: <defaults>
</compile_context>

<pallas_src>
import jax
import jax.numpy as jnp
from jax.experimental import pallas as pl
from jax.experimental.pallas import tpu as pltpu


def _round_up(x: int, m: int) -> int:
    return (x + m - 1) // m * m


def mlp_kernel(x_ref, w1_ref, b1_ref, w2_ref, b2_ref, o_ref):
    # x_ref: (TILE_B, D_in) bf16, w1_ref: (D_in, Hp) bf16, b1_ref: (1, Hp) f32
    # w2_ref: (Hp, Op) bf16, b2_ref: (1, Op) f32, o_ref: (TILE_B, Op) f32
    h = jnp.dot(x_ref[...], w1_ref[...], preferred_element_type=jnp.float32)
    h = h + b1_ref[...]
    # sigmoid(h): exp lands on the EUP; approx reciprocal also uses the EUP slot,
    # leaving VALU slots for the bias add / cast.
    h = pl.reciprocal(1.0 + jnp.exp(-h), approx=True)
    y = jnp.dot(h.astype(w2_ref.dtype), w2_ref[...],
                preferred_element_type=jnp.float32)
    o_ref[...] = (y + b2_ref[...]).astype(o_ref.dtype)


def my_first_network(x, w1, b1, w2, b2, *, tile_b=512):
    """Forward of MyFirstNetwork.

    x: (B, ...) — flattened to (B, input_dim) like x.view(B, -1).
    w1: (input_dim, hidden_dim), b1: (hidden_dim,) or (1, hidden_dim)
    w2: (hidden_dim, output_dim), b2: (output_dim,) or (1, output_dim)
    Returns float32 (B, output_dim).
    """
    B = x.shape[0]
    x2d = x.reshape(B, -1).astype(jnp.float32)
    d_in = x2d.shape[1]
    h_dim = w1.shape[1]
    o_dim = w2.shape[1]

    b1 = jnp.asarray(b1, jnp.float32).reshape(1, h_dim)
    b2 = jnp.asarray(b2, jnp.float32).reshape(1, o_dim)

    # Lane-dense padding of the feature dims (multiples of 128 lanes).
    hp = _round_up(h_dim, 128)
    op = _round_up(o_dim, 128)
    w1p = jnp.pad(jnp.asarray(w1, jnp.float32), ((0, 0), (0, hp - h_dim)))
    b1p = jnp.pad(b1, ((0, 0), (0, hp - h_dim)))
    w2p = jnp.pad(jnp.asarray(w2, jnp.float32), ((0, hp - h_dim), (0, op - o_dim)))
    b2p = jnp.pad(b2, ((0, 0), (0, op - o_dim)))
    # (padded hidden cols give sigmoid(0)=0.5, but the matching w2 rows are zero,
    #  so they contribute nothing to the output; padded out cols are sliced away.)

    # Batch tiling: largest tile (multiple of 16 sublanes for bf16) up to tile_b.
    tile_B = min(_round_up(tile_b, 16), _round_up(B, 16))
    Bp = _round_up(B, tile_B)
    x2dp = jnp.pad(x2d, ((0, Bp - B), (0, 0)))

    # bf16 MXU inputs, f32 accumulation; biases stay f32.
    xb = x2dp.astype(jnp.bfloat16)
    w1b = w1p.astype(jnp.bfloat16)
    w2b = w2p.astype(jnp.bfloat16)

    grid = (Bp // tile_B,)
    cost = pl.CostEstimate(
        flops=2 * Bp * (d_in * hp + hp * op),
        transcendentals=Bp * hp,
        bytes_accessed=(xb.size * 2 + w1b.size * 2 + w2b.size * 2
                        + b1p.size * 4 + b2p.size * 4 + Bp * op * 4),
    )

    out_padded = pl.pallas_call(
        mlp_kernel,
        out_shape=jax.ShapeDtypeStruct((Bp, op), jnp.float32),
        grid_spec=pl.GridSpec(
            grid=grid,
            in_specs=[
                pl.BlockSpec((tile_B, d_in), lambda i: (i, 0)),   # x: tiled over batch
                pl.BlockSpec((d_in, hp), lambda i: (0, 0)),       # W1: VMEM-resident
                pl.BlockSpec((1, hp), lambda i: (0, 0)),          # b1: VMEM-resident
                pl.BlockSpec((hp, op), lambda i: (0, 0)),         # W2: VMEM-resident
                pl.BlockSpec((1, op), lambda i: (0, 0)),          # b2: VMEM-resident
            ],
            out_specs=pl.BlockSpec((tile_B, op), lambda i: (i, 0)),
        ),
        compiler_params=pltpu.CompilerParams(
            dimension_semantics=("parallel",),
        ),
        cost_estimate=cost,
    )(xb, w1b, b1p, w2b, b2p)

    return out_padded[:B, :o_dim]


if __name__ == "__main__":
    # Small shapes implied by the forward: x of shape (B, C, H, W) flattened.
    B, C, Himg, Wimg = 8, 4, 4, 4
    input_dim = C * Himg * Wimg          # 64
    hidden_dim = 32
    output_dim = 16

    key = jax.random.PRNGKey(0)
    kx, kw1, kw2, kx2 = jax.random.split(key, 4)

    x = jax.random.normal(kx, (B, C, Himg, Wimg), dtype=jnp.float32)

    # PyTorch-Linear-style deterministic init; biases explicitly zeroed
    # (module __init__ does bias.data.fill_(0.0)).
    w1 = jax.random.uniform(kw1, (input_dim, hidden_dim), jnp.float32,
                            minval=-1.0, maxval=1.0) / jnp.sqrt(input_dim)
    b1 = jnp.zeros((hidden_dim,), jnp.float32)
    w2 = jax.random.uniform(kw2, (hidden_dim, output_dim), jnp.float32,
                            minval=-1.0, maxval=1.0) / jnp.sqrt(hidden_dim)
    b2 = jnp.zeros((output_dim,), jnp.float32)

    out = jax.block_until_ready(my_first_network(x, w1, b1, w2, b2))
    assert out.shape == (B, output_dim)

    # References: exact f32 forward, and a bf16-matmul-matched emulation.
    def ref_f32(xin):
        x2d = xin.reshape(xin.shape[0], -1)
        return jax.nn.sigmoid(x2d @ w1 + b1) @ w2 + b2

    def ref_bf16(xin):
        x2d = xin.reshape(xin.shape[0], -1).astype(jnp.bfloat16).astype(jnp.float32)
        w1b = w1.astype(jnp.bfloat16).astype(jnp.float32)
        w2b = w2.astype(jnp.bfloat16).astype(jnp.float32)
        h = jax.nn.sigmoid(x2d @ w1b + b1)
        return h.astype(jnp.bfloat16).astype(jnp.float32) @ w2b + b2

    assert jnp.allclose(out, ref_bf16(x), atol=1e-2, rtol=1e-2)
    assert jnp.allclose(out, ref_f32(x), atol=5e-2, rtol=5e-2)

    # Second config: exercises multi-step grid, batch padding and slicing.
    B2 = 200
    x2 = jax.random.normal(kx2, (B2, C, Himg, Wimg), dtype=jnp.float32)
    out2 = jax.block_until_ready(my_first_network(x2, w1, b1, w2, b2, tile_b=64))
    assert out2.shape == (B2, output_dim)
    assert jnp.allclose(out2, ref_bf16(x2), atol=1e-2, rtol=1e-2)
    assert jnp.allclose(out2, ref_f32(x2), atol=5e-2, rtol=5e-2)

    print("KERNEL_OK")
</pallas_src>

<mosaic_0001>
module attributes {stable_mosaic.version = 11 : i64} {
  func.func @mlp_kernel(%arg0: i32, %arg1: memref<16x64xbf16, #tpu.memory_space<vmem>>, %arg2: memref<64x128xbf16, #tpu.memory_space<vmem>>, %arg3: memref<1x128xf32, #tpu.memory_space<vmem>>, %arg4: memref<128x128xbf16, #tpu.memory_space<vmem>>, %arg5: memref<1x128xf32, #tpu.memory_space<vmem>>, %arg6: memref<16x128xf32, #tpu.memory_space<vmem>>) attributes {dimension_semantics = [#tpu.dimension_semantics<parallel>], iteration_bounds = array<i64: 1>, scalar_prefetch = 0 : i64, scratch_operands = 0 : i64, tpu.core_type = #tpu.core_type<tc>, window_params = [{transform_indices = @transform_0, window_bounds = array<i64: 16, 64>}, {pipeline_mode = #tpu.pipeline_mode<synchronous>, transform_indices = @transform_1, window_bounds = array<i64: 64, 128>}, {pipeline_mode = #tpu.pipeline_mode<synchronous>, transform_indices = @transform_2, window_bounds = array<i64: 1, 128>}, {pipeline_mode = #tpu.pipeline_mode<synchronous>, transform_indices = @transform_3, window_bounds = array<i64: 128, 128>}, {pipeline_mode = #tpu.pipeline_mode<synchronous>, transform_indices = @transform_4, window_bounds = array<i64: 1, 128>}, {transform_indices = @transform_5, window_bounds = array<i64: 16, 128>}]} {
    %c0 = arith.constant 0 : index
    %c0_0 = arith.constant 0 : index
    %0 = vector.load %arg1[%c0, %c0_0] : memref<16x64xbf16, #tpu.memory_space<vmem>>, vector<16x64xbf16>
    %c0_1 = arith.constant 0 : index
    %c0_2 = arith.constant 0 : index
    %1 = vector.load %arg2[%c0_1, %c0_2] : memref<64x128xbf16, #tpu.memory_space<vmem>>, vector<64x128xbf16>
    %cst = arith.constant dense<0.000000e+00> : vector<16x128xf32>
    %2 = tpu.matmul %0, %1, %cst {dimension_numbers = #tpu.dot_dimension_numbers<[1], [0], [0], [1], [0, 0, 1, 1], [], []>} : vector<16x64xbf16>, vector<64x128xbf16>, vector<16x128xf32> -> vector<16x128xf32>
    %c0_3 = arith.constant 0 : index
    %c0_4 = arith.constant 0 : index
    %3 = vector.load %arg3[%c0_3, %c0_4] : memref<1x128xf32, #tpu.memory_space<vmem>>, vector<1x128xf32>
    %4 = vector.broadcast %3 : vector<1x128xf32> to vector<16x128xf32>
    %5 = arith.addf %2, %4 : vector<16x128xf32>
    %cst_5 = arith.constant 0.000000e+00 : f32
    %6 = vector.broadcast %cst_5 : f32 to vector<16x128xf32>
    %7 = arith.subf %6, %5 : vector<16x128xf32>
    %8 = math.exp %7 : vector<16x128xf32>
    %cst_6 = arith.constant 1.000000e+00 : f32
    %9 = vector.broadcast %cst_6 : f32 to vector<16x128xf32>
    %10 = arith.addf %9, %8 : vector<16x128xf32>
    %11 = tpu.reciprocal %10 {approx = true} : vector<16x128xf32> -> vector<16x128xf32>
    %12 = arith.truncf %11 : vector<16x128xf32> to vector<16x128xbf16>
    %c0_7 = arith.constant 0 : index
    %c0_8 = arith.constant 0 : index
    %13 = vector.load %arg4[%c0_7, %c0_8] : memref<128x128xbf16, #tpu.memory_space<vmem>>, vector<128x128xbf16>
    %cst_9 = arith.constant dense<0.000000e+00> : vector<16x128xf32>
    %14 = tpu.matmul %12, %13, %cst_9 {dimension_numbers = #tpu.dot_dimension_numbers<[1], [0], [0], [1], [0, 0, 1, 1], [], []>} : vector<16x128xbf16>, vector<128x128xbf16>, vector<16x128xf32> -> vector<16x128xf32>
    %c0_10 = arith.constant 0 : index
    %c0_11 = arith.constant 0 : index
    %15 = vector.load %arg5[%c0_10, %c0_11] : memref<1x128xf32, #tpu.memory_space<vmem>>, vector<1x128xf32>
    %16 = vector.broadcast %15 : vector<1x128xf32> to vector<16x128xf32>
    %17 = arith.addf %14, %16 : vector<16x128xf32>
    %c0_12 = arith.constant 0 : index
    %c0_13 = arith.constant 0 : index
    %18 = vector.load %arg6[%c0_12, %c0_13] : memref<16x128xf32, #tpu.memory_space<vmem>>, vector<16x128xf32>
    tpu.vector_store %arg6[%c0_12, %c0_13], %17 {strides = array<i32>} : memref<16x128xf32, #tpu.memory_space<vmem>>, vector<16x128xf32>,
    return
  }
  func.func @transform_0(%arg0: i32) -> (i32, i32) {
    %c0_i32 = arith.constant 0 : i32
    %c0_i32_0 = arith.constant 0 : i32
    return %arg0, %c0_i32 : i32, i32
  }
  func.func @transform_1(%arg0: i32) -> (i32, i32) {
    %c0_i32 = arith.constant 0 : i32
    %c0_i32_0 = arith.constant 0 : i32
    %c0_i32_1 = arith.constant 0 : i32
    return %c0_i32, %c0_i32_0 : i32, i32
  }
  func.func @transform_2(%arg0: i32) -> (i32, i32) {
    %c0_i32 = arith.constant 0 : i32
    %c0_i32_0 = arith.constant 0 : i32
    %c0_i32_1 = arith.constant 0 : i32
    return %c0_i32, %c0_i32_0 : i32, i32
  }
  func.func @transform_3(%arg0: i32) -> (i32, i32) {
    %c0_i32 = arith.constant 0 : i32
    %c0_i32_0 = arith.constant 0 : i32
    %c0_i32_1 = arith.constant 0 : i32
    return %c0_i32, %c0_i32_0 : i32, i32
  }
  func.func @transform_4(%arg0: i32) -> (i32, i32) {
    %c0_i32 = arith.constant 0 : i32
    %c0_i32_0 = arith.constant 0 : i32
    %c0_i32_1 = arith.constant 0 : i32
    return %c0_i32, %c0_i32_0 : i32, i32
  }
  func.func @transform_5(%arg0: i32) -> (i32, i32) {
    %c0_i32 = arith.constant 0 : i32
    %c0_i32_0 = arith.constant 0 : i32
    return %arg0, %c0_i32 : i32, i32
  }
}

</mosaic_0001>

<llo_original>
// kernel: tpu_custom_call.1
$region0: #{tpu_custom_call.1}
  #allocation0 [shape = 'u32[]', space=smem, size = 0x4, offset = 0x4, fixed_abs, tag = 'smem constant byte address 0x4 - core index']
  #allocation1 [shape = 'u32[144,128]{1,0:T(1,128)}', space=vmem, size = 0x12000, scoped, tag = 'internal scratch']
  %s0 = inlined_call_operand.hbm [shape: bf16[16,64], index: 0, kind: input, shape index: {}]
  %s1 = inlined_call_operand.hbm [shape: bf16[64,128], index: 1, kind: input, shape index: {}]
  %s2 = inlined_call_operand.vmem [shape: f32[1,128], index: 2, kind: input, shape index: {}]
  %s3 = inlined_call_operand.hbm [shape: bf16[128,128], index: 3, kind: input, shape index: {}]
  %s4 = inlined_call_operand.vmem [shape: f32[1,128], index: 4, kind: input, shape index: {}]
  %s5 = inlined_call_operand.hbm [shape: f32[16,128], index: 5, kind: output, shape index: {}]
  %s6 = sld [smem:[#allocation0]]
  $region42: #{tpu_custom_call.1} parent=0
    _
  %s8 = ssub.s32 1, %s6
  %s9 = scalar_select 0, %s8, %s6
  $region1: #{tpu_custom_call.1} parent=0
    #allocation2 [shape = 'u8[4096]{0}', space=vmem, size = 0x1000, scoped, tag = 'input window, operand 0, single buffered']
    #allocation3 [shape = 's32[1]{0}', space=sflag, size = 0x4, scoped, tag = 'scoped memory for tpu_custom_call.1']
    #allocation4 [shape = 's32[1]{0}', space=sflag, size = 0x4, scoped, tag = 'scoped memory for tpu_custom_call.1']
    #allocation5 [shape = 'u8[16384]{0}', space=vmem, size = 0x4000, scoped, tag = 'input window, operand 1, single buffered']
    #allocation6 [shape = 's32[1]{0}', space=sflag, size = 0x4, scoped, tag = 'scoped memory for tpu_custom_call.1']
    #allocation7 [shape = 'u8[32768]{0}', space=vmem, size = 0x8000, scoped, tag = 'input window, operand 3, single buffered']
    #allocation8 [shape = 'u8[8192]{0}', space=vmem, size = 0x2000, scoped, tag = 'output window, operand 0, single buffered']
    %10 = vsyncpa [#allocation3], 0
    %11 = vsyncpa [#allocation6], 0
    %12 = vsyncpa [#allocation4], 0
    // Predicated region
    $region2: #{tpu_custom_call.1} parent=1 // pred_check
      _
    $region3: #{tpu_custom_call.1} parent=1 // pred_check_branch
      %14 = sbr.rel (0) target = $region5
    $region4: #{tpu_custom_call.1} parent=1 // pred_region
      %s16 = ssub.s32 128, 128
      %17 = vsyncadd [#allocation3], %s16
      %s18 = sshll.u32 [#allocation2], 4
      %s19 = int_to_ptr.vmem [resolvable:$true] %s18
      %24 = dma.hbm_to_vmem [thread:$0]  %s0, 128, %s19, [#allocation3], 64, 64, 4
    $region5: #{tpu_custom_call.1} parent=1 // pred_fallthru
      _
    // Predicated region
    $region6: #{tpu_custom_call.1} parent=1 // pred_check
      _
    $region7: #{tpu_custom_call.1} parent=1 // pred_check_branch
      %26 = sbr.rel (0) target = $region9
    $region8: #{tpu_custom_call.1} parent=1 // pred_region
      %s28 = ssub.s32 512, 512
      %29 = vsyncadd [#allocation6], %s28
      %s30 = sshll.u32 [#allocation5], 4
      %s31 = int_to_ptr.vmem [resolvable:$true] %s30
      %36 = dma.hbm_to_vmem [thread:$0]  %s1, 512, %s31, [#allocation6], 64, 64, 4
    $region9: #{tpu_custom_call.1} parent=1 // pred_fallthru
      _
    // Predicated region
    $region10: #{tpu_custom_call.1} parent=1 // pred_check
      _
    $region11: #{tpu_custom_call.1} parent=1 // pred_check_branch
      %38 = sbr.rel (0) target = $region13
    $region12: #{tpu_custom_call.1} parent=1 // pred_region
      _
    $region13: #{tpu_custom_call.1} parent=1 // pred_fallthru
      _
    // Predicated region
    $region14: #{tpu_custom_call.1} parent=1 // pred_check
      _
    $region15: #{tpu_custom_call.1} parent=1 // pred_check_branch
      %40 = sbr.rel (0) target = $region17
    $region16: #{tpu_custom_call.1} parent=1 // pred_region
      %s42 = ssub.s32 1024, 1024
      %43 = vsyncadd [#allocation6], %s42
      %s44 = sshll.u32 [#allocation7], 4
      %s45 = int_to_ptr.vmem [resolvable:$true] %s44
      %50 = dma.hbm_to_vmem [thread:$0]  %s3, 1024, %s45, [#allocation6], 64, 64, 4
    $region17: #{tpu_custom_call.1} parent=1 // pred_fallthru
      _
    // Predicated region
    $region18: #{tpu_custom_call.1} parent=1 // pred_check
      _
    $region19: #{tpu_custom_call.1} parent=1 // pred_check_branch
      %52 = sbr.rel (0) target = $region21
    $region20: #{tpu_custom_call.1} parent=1 // pred_region
      _
    $region21: #{tpu_custom_call.1} parent=1 // pred_fallthru
      _
    // Predicated region
    $region22: #{tpu_custom_call.1} parent=1 // pred_check
      _
    $region23: #{tpu_custom_call.1} parent=1 // pred_check_branch
      %54 = sbr.rel (0) target = $region25
    $region24: #{tpu_custom_call.1} parent=1 // pred_region
      %55 = dma.done [#allocation3], 128
    $region25: #{tpu_custom_call.1} parent=1 // pred_fallthru
      _
    // Predicated region
    $region26: #{tpu_custom_call.1} parent=1 // pred_check
      _
    $region27: #{tpu_custom_call.1} parent=1 // pred_check_branch
      %57 = sbr.rel (0) target = $region29
    $region28: #{tpu_custom_call.1} parent=1 // pred_region
      %58 = dma.done [#allocation6], 512
    $region29: #{tpu_custom_call.1} parent=1 // pred_fallthru
      _
    // Predicated region
    $region30: #{tpu_custom_call.1} parent=1 // pred_check
      _
    $region31: #{tpu_custom_call.1} parent=1 // pred_check_branch
      %60 = sbr.rel (0) target = $region33
    $region32: #{tpu_custom_call.1} parent=1 // pred_region
      %61 = dma.done [#allocation6], 1024
    $region33: #{tpu_custom_call.1} parent=1 // pred_fallthru
      _
    %v63 = vld [vmem:[#allocation2] sm:$0xf]
    %v64 = vld [vmem:[#allocation2 + $0x4] sm:$0xf]
    %v65 = vld [vmem:[#allocation5] sm:$0xf]
    %v66 = vld [vmem:[#allocation5 + $0x4] sm:$0xf]
    %v67 = vld [vmem:[#allocation5 + $0x8] sm:$0xf]
    %v68 = vld [vmem:[#allocation5 + $0xc] sm:$0xf]
    %v69 = vld [vmem:[#allocation5 + $0x10] sm:$0xf]
    %v70 = vld [vmem:[#allocation5 + $0x14] sm:$0xf]
    %v71 = vld [vmem:[#allocation5 + $0x18] sm:$0xf]
    %v72 = vld [vmem:[#allocation5 + $0x1c] sm:$0xf]
    %v73 = vld [vmem:[%s2] sm:$0x1]
    %v75 = vlaneseq
    %v76 = vshrl.u32 %v75, 7
    %v77 = vsub.s32 0, %v76
    %v78 = vrot.slane %v73, %v77
    %v82 = vunpack.c.l.b16 %v63
    %v83 = vunpack.c.l.b16 %v64
    %v84 = vpack.c.b16 %v83, %v82
    %v93 = vunpack.c.l.b16 %v65
    %v94 = vunpack.c.l.b16 %v66
    %v95 = vunpack.c.l.b16 %v67
    %v96 = vunpack.c.l.b16 %v68
    %v97 = vunpack.c.l.b16 %v69
    %v98 = vunpack.c.l.b16 %v70
    %v99 = vunpack.c.l.b16 %v71
    %v100 = vunpack.c.l.b16 %v72
    %v101 = vpack.c.b16 %v94, %v93
    %v102 = vpack.c.b16 %v96, %v95
    %v103 = vpack.c.b16 %v98, %v97
    %v104 = vpack.c.b16 %v100, %v99
    %vm109 = vcmask 523264
    %v111 = vsel %vm109, %v84, 0
    %113 = vmatprep.subr.bf16.mxu0 0
    %114 = vmatpush1.bf16.msra.mxu0 0
    %115 = vmatprep.subr.bf16.mxu0 0
    %116 = vmatpush1.bf16.msra.mxu0 0
    %117 = vmatprep.subr.bf16.mxu0 0
    %118 = vmatpush1.bf16.msra.mxu0 0
    %119 = vmatprep.subr.bf16.mxu0 0
    %120 = vmatpush1.bf16.msra.mxu0 0
    %121 = vmatprep.subr.bf16.mxu0 0
    %122 = vmatpush1.bf16.msra.mxu0 %v104
    %123 = vmatprep.subr.bf16.mxu0 0
    %124 = vmatpush1.bf16.msra.mxu0 %v103
    %125 = vmatprep.subr.bf16.mxu0 0
    %126 = vmatpush1.bf16.msra.mxu0 %v102
    %127 = vmatprep.subr.bf16.mxu0 0
    %128 = vmatpush1.bf16.msra.mxu0 %v101
    %129 = vmatprep.subr.bf16.mxu0 0
    %130 = vmatpush2.bf16.msra.mxu0 0
    %131 = vmatprep.subr.bf16.mxu0 0
    %132 = vmatpush2.bf16.msra.mxu0 0
    %133 = vmatprep.subr.bf16.mxu0 0
    %134 = vmatpush2.bf16.msra.mxu0 0
    %135 = vmatprep.subr.bf16.mxu0 0
    %136 = vmatpush2.bf16.msra.mxu0 0
    %137 = vmatprep.subr.bf16.mxu0 0
    %138 = vmatpush2.bf16.msra.mxu0 0
    %139 = vmatprep.subr.bf16.mxu0 0
    %140 = vmatpush2.bf16.msra.mxu0 0
    %141 = vmatprep.subr.bf16.mxu0 0
    %142 = vmatpush2.bf16.msra.mxu0 0
    %143 = vmatprep.subr.bf16.mxu0 0
    %144 = vmatpush2.bf16.msra.mxu0 0
    %145 = vmatprep.mubr.bf16.mxu0 0
    %146 = vmatmul.mubr.bf16.gmra.mxu0 %v111
    %v147 = vpop.f32.mrf.mxu0
    %v148 = vadd.f32 %v78, %v147
    %v149 = vpop.f32.mrf.mxu0
    %v150 = vpop.f32.mrf.mxu0
    %v151 = vadd.f32 %v78, %v150
    %v152 = vpop.f32.mrf.mxu0
    %153 = vdwg.mxu0
    %v154 = vsub.f32 0.0, %v148
    %v155 = vsub.f32 0.0, %v151
    %v156 = vmul.f32 %v154, 1.442695
    %v157 = vpow.pop %v156
    %v158 = vmul.f32 %v155, 1.442695
    %v159 = vpow.pop %v158
    %v160 = vadd.f32 %v157, 1.0
    %v161 = vadd.f32 %v159, 1.0
    %v162 = vrcp.pop %v160
    %v163 = vrcp.pop %v161
    %v164 = vpack.c.bf16 %v163, %v162
    %v165 = vld [vmem:[#allocation7] sm:$0xf]
    %v166 = vld [vmem:[#allocation7 + $0x4] sm:$0xf]
    %v167 = vld [vmem:[#allocation7 + $0x8] sm:$0xf]
    %v168 = vld [vmem:[#allocation7 + $0xc] sm:$0xf]
    %v169 = vld [vmem:[#allocation7 + $0x10] sm:$0xf]
    %v170 = vld [vmem:[#allocation7 + $0x14] sm:$0xf]
    %v171 = vld [vmem:[#allocation7 + $0x18] sm:$0xf]
    %v172 = vld [vmem:[#allocation7 + $0x1c] sm:$0xf]
    %v173 = vld [vmem:[#allocation7 + $0x20] sm:$0xf]
    %v174 = vld [vmem:[#allocation7 + $0x24] sm:$0xf]
    %v175 = vld [vmem:[#allocation7 + $0x28] sm:$0xf]
    %v176 = vld [vmem:[#allocation7 + $0x2c] sm:$0xf]
    %v177 = vld [vmem:[#allocation7 + $0x30] sm:$0xf]
    %v178 = vld [vmem:[#allocation7 + $0x34] sm:$0xf]
    %v179 = vld [vmem:[#allocation7 + $0x38] sm:$0xf]
    %v180 = vld [vmem:[#allocation7 + $0x3c] sm:$0xf]
    %v181 = vld [vmem:[%s4] sm:$0x1]
    %v183 = vlaneseq
    %v184 = vshrl.u32 %v183, 7
    %v185 = vsub.s32 0, %v184
    %v186 = vrot.slane %v181, %v185
    %v204 = vunpack.c.l.b16 %v165
    %v205 = vunpack.c.l.b16 %v166
    %v206 = vunpack.c.l.b16 %v167
    %v207 = vunpack.c.l.b16 %v168
    %v208 = vunpack.c.l.b16 %v169
    %v209 = vunpack.c.l.b16 %v170
    %v210 = vunpack.c.l.b16 %v171
    %v211 = vunpack.c.l.b16 %v172
    %v212 = vunpack.c.l.b16 %v173
    %v213 = vunpack.c.l.b16 %v174
    %v214 = vunpack.c.l.b16 %v175
    %v215 = vunpack.c.l.b16 %v176
    %v216 = vunpack.c.l.b16 %v177
    %v217 = vunpack.c.l.b16 %v178
    %v218 = vunpack.c.l.b16 %v179
    %v219 = vunpack.c.l.b16 %v180
    %v220 = vpack.c.b16 %v205, %v204
    %v221 = vpack.c.b16 %v207, %v206
    %v222 = vpack.c.b16 %v209, %v208
    %v223 = vpack.c.b16 %v211, %v210
    %v224 = vpack.c.b16 %v213, %v212
    %v225 = vpack.c.b16 %v215, %v214
    %v226 = vpack.c.b16 %v217, %v216
    %v227 = vpack.c.b16 %v219, %v218
    %236 = vmatprep.subr.bf16.mxu0 0
    %237 = vmatpush1.bf16.msra.mxu0 %v227
    %238 = vmatprep.subr.bf16.mxu0 0
    %239 = vmatpush1.bf16.msra.mxu0 %v226
    %240 = vmatprep.subr.bf16.mxu0 0
    %241 = vmatpush1.bf16.msra.mxu0 %v225
    %242 = vmatprep.subr.bf16.mxu0 0
    %243 = vmatpush1.bf16.msra.mxu0 %v224
    %244 = vmatprep.subr.bf16.mxu0 0
    %245 = vmatpush1.bf16.msra.mxu0 %v223
    %246 = vmatprep.subr.bf16.mxu0 0
    %247 = vmatpush1.bf16.msra.mxu0 %v222
    %248 = vmatprep.subr.bf16.mxu0 0
    %249 = vmatpush1.bf16.msra.mxu0 %v221
    %250 = vmatprep.subr.bf16.mxu0 0
    %251 = vmatpush1.bf16.msra.mxu0 %v220
    %252 = vmatprep.subr.bf16.mxu0 0
    %253 = vmatpush2.bf16.msra.mxu0 0
    %254 = vmatprep.subr.bf16.mxu0 0
    %255 = vmatpush2.bf16.msra.mxu0 0
    %256 = vmatprep.subr.bf16.mxu0 0
    %257 = vmatpush2.bf16.msra.mxu0 0
    %258 = vmatprep.subr.bf16.mxu0 0
    %259 = vmatpush2.bf16.msra.mxu0 0
    %260 = vmatprep.subr.bf16.mxu0 0
    %261 = vmatpush2.bf16.msra.mxu0 0
    %262 = vmatprep.subr.bf16.mxu0 0
    %263 = vmatpush2.bf16.msra.mxu0 0
    %264 = vmatprep.subr.bf16.mxu0 0
    %265 = vmatpush2.bf16.msra.mxu0 0
    %266 = vmatprep.subr.bf16.mxu0 0
    %267 = vmatpush2.bf16.msra.mxu0 0
    %268 = vmatprep.mubr.bf16.mxu0 0
    %269 = vmatmul.mubr.bf16.gmra.mxu0 %v164
    %v270 = vpop.f32.mrf.mxu0
    %v271 = vadd.f32 %v186, %v270
    %v272 = vpop.f32.mrf.mxu0
    %v273 = vpop.f32.mrf.mxu0
    %v274 = vadd.f32 %v186, %v273
    %v275 = vpop.f32.mrf.mxu0
    %276 = vdwg.mxu0
    %277 = vst [vmem:[#allocation8] sm:$0xff] %v271
    %278 = vst [vmem:[#allocation8 + $0x8] sm:$0xff] %v274
    // Predicated region
    $region34: #{tpu_custom_call.1} parent=1 // pred_check
      _
    $region35: #{tpu_custom_call.1} parent=1 // pred_check_branch
      %280 = sbr.rel (0) target = $region37
    $region36: #{tpu_custom_call.1} parent=1 // pred_region
      %s282 = ssub.s32 256, 256
      %283 = vsyncadd [#allocation4], %s282
      %s284 = sshll.u32 [#allocation8], 4
      %s285 = int_to_ptr.vmem [resolvable:$true] %s284
      %290 = dma.vmem_to_hbm [thread:$0]  %s285, 256, %s5, [#allocation4], 128, 128, 8
    $region37: #{tpu_custom_call.1} parent=1 // pred_fallthru
      _
    // Predicated region
    $region38: #{tpu_custom_call.1} parent=1 // pred_check
      _
    $region39: #{tpu_custom_call.1} parent=1 // pred_check_branch
      %292 = sbr.rel (0) target = $region41
    $region40: #{tpu_custom_call.1} parent=1 // pred_region
      %293 = dma.done [#allocation4], 256
    $region41: #{tpu_custom_call.1} parent=1 // pred_fallthru
      _
    %294 = vsyncpa [#allocation3], 1
    %295 = vsyncpa [#allocation6], 1
    %296 = vsyncpa [#allocation4], 1

</llo_original>
